<compile_context>
chip_gen: v7x
topology: tpu7x:2x2x1
jax: 0.10.0
libtpu: 0.0.40
codegen_flags: <defaults>
</compile_context>

<pallas_src>
import functools

import jax
import jax.numpy as jnp
from jax.experimental import pallas as pl
from jax.experimental.pallas import tpu as pltpu

_LANES = 128
_SUBLANES = 8


def _round_up(a, b):
    return (a + b - 1) // b * b


def _embedder_kernel(x_ref, o_ref, *, freqs, include_input):
    # x_ref: (tile, 128) lane-dense slab of flattened input elements (f32 or bf16).
    # o_ref: (P, tile, 128); part p holds fn_p applied elementwise to the slab.
    x = x_ref[...].astype(jnp.float32)     # keep sin/cos args in f32 for precision
    p = 0
    if include_input:
        o_ref[0] = x.astype(o_ref.dtype)
        p = 1
    for f in freqs:                        # static python loop, unrolled at trace time
        xf = x * f                         # VALU; f is a baked compile-time constant
        o_ref[p] = jnp.sin(xf).astype(o_ref.dtype)       # EUP -> direct slab store
        o_ref[p + 1] = jnp.cos(xf).astype(o_ref.dtype)
        p += 2


def make_embedder(input_dims=4,
                  num_freqs=4,
                  max_freq_log2=None,
                  include_input=True,
                  log_sampling=True,
                  tile_rows=1024,
                  out_dtype=None):
    """Returns (embed_fn, out_dim) matching the PyTorch Embedder semantics."""
    if max_freq_log2 is None:
        max_freq_log2 = num_freqs - 1

    if log_sampling:
        freq_bands = 2.0 ** jnp.linspace(0.0, float(max_freq_log2), num_freqs)
    else:
        freq_bands = jnp.linspace(2.0 ** 0.0, 2.0 ** float(max_freq_log2), num_freqs)
    freqs = tuple(float(f) for f in freq_bands)   # bake as compile-time constants

    n_parts = (1 if include_input else 0) + 2 * num_freqs
    assert n_parts >= 1
    out_dim = n_parts * input_dims

    kernel = functools.partial(_embedder_kernel, freqs=freqs,
                               include_input=include_input)

    tile_rows = _round_up(max(int(tile_rows), _SUBLANES), _SUBLANES)

    def embed(inputs):
        assert inputs.shape[-1] == input_dims, (inputs.shape, input_dims)
        lead_shape = inputs.shape[:-1]
        n_rows = 1
        for s in lead_shape:
            n_rows *= int(s)
        e = n_rows * input_dims

        odt = inputs.dtype if out_dtype is None else out_dtype

        # Flatten to a lane-dense (R, 128) slab; pad only to the 8x128 element tile.
        x_flat = inputs.reshape(e)
        pad = (-e) % (_SUBLANES * _LANES)
        if pad:
            x_flat = jnp.pad(x_flat, (0, pad))
        r = (e + pad) // _LANES                       # multiple of 8
        x2d = x_flat.reshape(r, _LANES)

        tile = min(tile_rows, r)                      # both multiples of 8
        grid = (pl.cdiv(r, tile),)                    # partial tail block is masked

        out = pl.pallas_call(
            kernel,
            out_shape=jax.ShapeDtypeStruct((n_parts, r, _LANES), odt),
            grid_spec=pltpu.PrefetchScalarGridSpec(
                num_scalar_prefetch=0,
                grid=grid,
                in_specs=[pl.BlockSpec((tile, _LANES), lambda i: (i, 0))],
                out_specs=pl.BlockSpec((n_parts, tile, _LANES),
                                       lambda i: (0, i, 0)),
            ),
            compiler_params=pltpu.CompilerParams(
                dimension_semantics=("parallel",)),
        )(x2d)

        # Restore the torch.cat channel layout: (P, N, d) -> (N, P*d).
        out = out.reshape(n_parts, r * _LANES)
        if pad:
            out = out[:, :e]
        out = out.reshape(n_parts, n_rows, input_dims)
        out = jnp.swapaxes(out, 0, 1).reshape(*lead_shape, out_dim)
        return out

    return embed, out_dim


def _embed_ref(inputs, *, input_dims, num_freqs, max_freq_log2,
               include_input=True, log_sampling=True):
    """Pure-JAX reference mirroring the PyTorch forward."""
    del input_dims
    if log_sampling:
        freq_bands = 2.0 ** jnp.linspace(0.0, float(max_freq_log2), num_freqs)
    else:
        freq_bands = jnp.linspace(2.0 ** 0.0, 2.0 ** float(max_freq_log2), num_freqs)
    parts = []
    if include_input:
        parts.append(inputs)
    for f in freq_bands:
        parts.append(jnp.sin(inputs * f))
        parts.append(jnp.cos(inputs * f))
    return jnp.concatenate(parts, axis=-1)


if __name__ == "__main__":
    key = jax.random.PRNGKey(0)
    k1, k2 = jax.random.split(key)

    input_dims = 4
    num_freqs = 4
    max_freq_log2 = num_freqs - 1

    embed_fn, out_dim = make_embedder(
        input_dims=input_dims, num_freqs=num_freqs,
        max_freq_log2=max_freq_log2, include_input=True, log_sampling=True)

    # Case 1: small ray-sample-like batch (exercises the element-padding path).
    x1 = jax.random.normal(k1, (2, 8, input_dims), dtype=jnp.float32)
    y1 = jax.block_until_ready(embed_fn(x1))
    assert y1.shape == (2, 8, out_dim), (y1.shape, out_dim)
    y1_ref = _embed_ref(x1, input_dims=input_dims, num_freqs=num_freqs,
                        max_freq_log2=max_freq_log2)
    assert jnp.allclose(y1, y1_ref, atol=1e-5, rtol=1e-5), \
        float(jnp.max(jnp.abs(y1 - y1_ref)))

    # Case 2: larger batch with a small tile to exercise a multi-step grid
    # with a partial (masked) tail block.
    embed_small_tile, _ = make_embedder(
        input_dims=input_dims, num_freqs=num_freqs,
        max_freq_log2=max_freq_log2, include_input=True, log_sampling=True,
        tile_rows=128)
    x2 = jax.random.normal(k2, (2, 2500, input_dims), dtype=jnp.float32)
    y2 = jax.block_until_ready(embed_small_tile(x2))
    assert y2.shape == (2, 2500, out_dim), (y2.shape, out_dim)
    y2_ref = _embed_ref(x2, input_dims=input_dims, num_freqs=num_freqs,
                        max_freq_log2=max_freq_log2)
    assert jnp.allclose(y2, y2_ref, atol=1e-5, rtol=1e-5), \
        float(jnp.max(jnp.abs(y2 - y2_ref)))

    print("KERNEL_OK")
</pallas_src>

<mosaic_0001>
module attributes {stable_mosaic.version = 11 : i64} {
  func.func @_embedder_kernel(%arg0: i32, %arg1: memref<8x128xf32, #tpu.memory_space<vmem>>, %arg2: memref<9x8x128xf32, #tpu.memory_space<vmem>>) attributes {dimension_semantics = [#tpu.dimension_semantics<parallel>], iteration_bounds = array<i64: 1>, scalar_prefetch = 0 : i64, scratch_operands = 0 : i64, tpu.core_type = #tpu.core_type<tc>, window_params = [{transform_indices = @transform_0, window_bounds = array<i64: 8, 128>}, {transform_indices = @transform_1, window_bounds = array<i64: 9, 8, 128>}]} {
    %c0 = arith.constant 0 : index
    %c0_0 = arith.constant 0 : index
    %0 = vector.load %arg1[%c0, %c0_0] : memref<8x128xf32, #tpu.memory_space<vmem>>, vector<8x128xf32>
    %c0_1 = arith.constant 0 : index
    %c0_2 = arith.constant 0 : index
    %c0_3 = arith.constant 0 : index
    %1 = vector.load %arg2[%c0_1, %c0_2, %c0_3] : memref<9x8x128xf32, #tpu.memory_space<vmem>>, vector<1x8x128xf32>
    %2 = vector.shape_cast %1 : vector<1x8x128xf32> to vector<8x128xf32>
    %3 = vector.shape_cast %0 : vector<8x128xf32> to vector<1x8x128xf32>
    tpu.vector_store %arg2[%c0_1, %c0_2, %c0_3], %3 {strides = array<i32>} : memref<9x8x128xf32, #tpu.memory_space<vmem>>, vector<1x8x128xf32>,
    %cst = arith.constant 1.000000e+00 : f32
    %4 = vector.broadcast %cst : f32 to vector<8x128xf32>
    %5 = arith.mulf %0, %4 : vector<8x128xf32>
    %6 = math.sin %5 : vector<8x128xf32>
    %c1 = arith.constant 1 : index
    %c0_4 = arith.constant 0 : index
    %c0_5 = arith.constant 0 : index
    %7 = vector.load %arg2[%c1, %c0_4, %c0_5] : memref<9x8x128xf32, #tpu.memory_space<vmem>>, vector<1x8x128xf32>
    %8 = vector.shape_cast %7 : vector<1x8x128xf32> to vector<8x128xf32>
    %9 = vector.shape_cast %6 : vector<8x128xf32> to vector<1x8x128xf32>
    tpu.vector_store %arg2[%c1, %c0_4, %c0_5], %9 {strides = array<i32>} : memref<9x8x128xf32, #tpu.memory_space<vmem>>, vector<1x8x128xf32>,
    %10 = math.cos %5 : vector<8x128xf32>
    %c2 = arith.constant 2 : index
    %c0_6 = arith.constant 0 : index
    %c0_7 = arith.constant 0 : index
    %11 = vector.load %arg2[%c2, %c0_6, %c0_7] : memref<9x8x128xf32, #tpu.memory_space<vmem>>, vector<1x8x128xf32>
    %12 = vector.shape_cast %11 : vector<1x8x128xf32> to vector<8x128xf32>
    %13 = vector.shape_cast %10 : vector<8x128xf32> to vector<1x8x128xf32>
    tpu.vector_store %arg2[%c2, %c0_6, %c0_7], %13 {strides = array<i32>} : memref<9x8x128xf32, #tpu.memory_space<vmem>>, vector<1x8x128xf32>,
    %cst_8 = arith.constant 2.000000e+00 : f32
    %14 = vector.broadcast %cst_8 : f32 to vector<8x128xf32>
    %15 = arith.mulf %0, %14 : vector<8x128xf32>
    %16 = math.sin %15 : vector<8x128xf32>
    %c3 = arith.constant 3 : index
    %c0_9 = arith.constant 0 : index
    %c0_10 = arith.constant 0 : index
    %17 = vector.load %arg2[%c3, %c0_9, %c0_10] : memref<9x8x128xf32, #tpu.memory_space<vmem>>, vector<1x8x128xf32>
    %18 = vector.shape_cast %17 : vector<1x8x128xf32> to vector<8x128xf32>
    %19 = vector.shape_cast %16 : vector<8x128xf32> to vector<1x8x128xf32>
    tpu.vector_store %arg2[%c3, %c0_9, %c0_10], %19 {strides = array<i32>} : memref<9x8x128xf32, #tpu.memory_space<vmem>>, vector<1x8x128xf32>,
    %20 = math.cos %15 : vector<8x128xf32>
    %c4 = arith.constant 4 : index
    %c0_11 = arith.constant 0 : index
    %c0_12 = arith.constant 0 : index
    %21 = vector.load %arg2[%c4, %c0_11, %c0_12] : memref<9x8x128xf32, #tpu.memory_space<vmem>>, vector<1x8x128xf32>
    %22 = vector.shape_cast %21 : vector<1x8x128xf32> to vector<8x128xf32>
    %23 = vector.shape_cast %20 : vector<8x128xf32> to vector<1x8x128xf32>
    tpu.vector_store %arg2[%c4, %c0_11, %c0_12], %23 {strides = array<i32>} : memref<9x8x128xf32, #tpu.memory_space<vmem>>, vector<1x8x128xf32>,
    %cst_13 = arith.constant 4.000000e+00 : f32
    %24 = vector.broadcast %cst_13 : f32 to vector<8x128xf32>
    %25 = arith.mulf %0, %24 : vector<8x128xf32>
    %26 = math.sin %25 : vector<8x128xf32>
    %c5 = arith.constant 5 : index
    %c0_14 = arith.constant 0 : index
    %c0_15 = arith.constant 0 : index
    %27 = vector.load %arg2[%c5, %c0_14, %c0_15] : memref<9x8x128xf32, #tpu.memory_space<vmem>>, vector<1x8x128xf32>
    %28 = vector.shape_cast %27 : vector<1x8x128xf32> to vector<8x128xf32>
    %29 = vector.shape_cast %26 : vector<8x128xf32> to vector<1x8x128xf32>
    tpu.vector_store %arg2[%c5, %c0_14, %c0_15], %29 {strides = array<i32>} : memref<9x8x128xf32, #tpu.memory_space<vmem>>, vector<1x8x128xf32>,
    %30 = math.cos %25 : vector<8x128xf32>
    %c6 = arith.constant 6 : index
    %c0_16 = arith.constant 0 : index
    %c0_17 = arith.constant 0 : index
    %31 = vector.load %arg2[%c6, %c0_16, %c0_17] : memref<9x8x128xf32, #tpu.memory_space<vmem>>, vector<1x8x128xf32>
    %32 = vector.shape_cast %31 : vector<1x8x128xf32> to vector<8x128xf32>
    %33 = vector.shape_cast %30 : vector<8x128xf32> to vector<1x8x128xf32>
    tpu.vector_store %arg2[%c6, %c0_16, %c0_17], %33 {strides = array<i32>} : memref<9x8x128xf32, #tpu.memory_space<vmem>>, vector<1x8x128xf32>,
    %cst_18 = arith.constant 8.000000e+00 : f32
    %34 = vector.broadcast %cst_18 : f32 to vector<8x128xf32>
    %35 = arith.mulf %0, %34 : vector<8x128xf32>
    %36 = math.sin %35 : vector<8x128xf32>
    %c7 = arith.constant 7 : index
    %c0_19 = arith.constant 0 : index
    %c0_20 = arith.constant 0 : index
    %37 = vector.load %arg2[%c7, %c0_19, %c0_20] : memref<9x8x128xf32, #tpu.memory_space<vmem>>, vector<1x8x128xf32>
    %38 = vector.shape_cast %37 : vector<1x8x128xf32> to vector<8x128xf32>
    %39 = vector.shape_cast %36 : vector<8x128xf32> to vector<1x8x128xf32>
    tpu.vector_store %arg2[%c7, %c0_19, %c0_20], %39 {strides = array<i32>} : memref<9x8x128xf32, #tpu.memory_space<vmem>>, vector<1x8x128xf32>,
    %40 = math.cos %35 : vector<8x128xf32>
    %c8 = arith.constant 8 : index
    %c0_21 = arith.constant 0 : index
    %c0_22 = arith.constant 0 : index
    %41 = vector.load %arg2[%c8, %c0_21, %c0_22] : memref<9x8x128xf32, #tpu.memory_space<vmem>>, vector<1x8x128xf32>
    %42 = vector.shape_cast %41 : vector<1x8x128xf32> to vector<8x128xf32>
    %43 = vector.shape_cast %40 : vector<8x128xf32> to vector<1x8x128xf32>
    tpu.vector_store %arg2[%c8, %c0_21, %c0_22], %43 {strides = array<i32>} : memref<9x8x128xf32, #tpu.memory_space<vmem>>, vector<1x8x128xf32>,
    return
  }
  func.func @transform_0(%arg0: i32) -> (i32, i32) {
    %c0_i32 = arith.constant 0 : i32
    %c0_i32_0 = arith.constant 0 : i32
    return %arg0, %c0_i32 : i32, i32
  }
  func.func @transform_1(%arg0: i32) -> (i32, i32, i32) {
    %c0_i32 = arith.constant 0 : i32
    %c0_i32_0 = arith.constant 0 : i32
    %c0_i32_1 = arith.constant 0 : i32
    return %c0_i32, %arg0, %c0_i32_0 : i32, i32, i32
  }
}

</mosaic_0001>

<llo_original>
// kernel: tpu_custom_call.1
$region0: #{tpu_custom_call.1}
  #allocation0 [shape = 'u32[]', space=smem, size = 0x4, offset = 0x4, fixed_abs, tag = 'smem constant byte address 0x4 - core index']
  #allocation1 [shape = 'u32[144,128]{1,0:T(1,128)}', space=vmem, size = 0x12000, scoped, tag = 'internal scratch']
  %s0 = inlined_call_operand.hbm [shape: f32[8,128], index: 0, kind: input, shape index: {}]
  %s1 = inlined_call_operand.hbm [shape: f32[9,8,128], index: 1, kind: output, shape index: {}]
  %s2 = sld [smem:[#allocation0]]
  $region18: #{tpu_custom_call.1} parent=0
    _
  %s4 = ssub.s32 1, %s2
  %s5 = scalar_select 0, %s4, %s2
  $region1: #{tpu_custom_call.1} parent=0
    #allocation2 [shape = 'u8[4096]{0}', space=vmem, size = 0x1000, scoped, tag = 'input window, operand 0, single buffered']
    #allocation3 [shape = 's32[1]{0}', space=sflag, size = 0x4, scoped, tag = 'scoped memory for tpu_custom_call.1']
    #allocation4 [shape = 's32[1]{0}', space=sflag, size = 0x4, scoped, tag = 'scoped memory for tpu_custom_call.1']
    #allocation5 [shape = 'u8[36864]{0}', space=vmem, size = 0x9000, scoped, tag = 'output window, operand 0, single buffered']
    %6 = vsyncpa [#allocation3], 0
    %7 = vsyncpa [#allocation4], 0
    // Predicated region
    $region2: #{tpu_custom_call.1} parent=1 // pred_check
      _
    $region3: #{tpu_custom_call.1} parent=1 // pred_check_branch
      %9 = sbr.rel (0) target = $region5
    $region4: #{tpu_custom_call.1} parent=1 // pred_region
      %s11 = ssub.s32 128, 128
      %12 = vsyncadd [#allocation3], %s11
      %s14 = sshll.u32 [#allocation2], 4
      %s15 = int_to_ptr.vmem [resolvable:$true] %s14
      %17 = dma.hbm_to_vmem [thread:$0]  %s0, 128, %s15, [#allocation3]
    $region5: #{tpu_custom_call.1} parent=1 // pred_fallthru
      _
    // Predicated region
    $region6: #{tpu_custom_call.1} parent=1 // pred_check
      _
    $region7: #{tpu_custom_call.1} parent=1 // pred_check_branch
      %19 = sbr.rel (0) target = $region9
    $region8: #{tpu_custom_call.1} parent=1 // pred_region
      %20 = dma.done [#allocation3], 128
    $region9: #{tpu_custom_call.1} parent=1 // pred_fallthru
      _
    %v21 = vld [vmem:[#allocation2] sm:$0xff]
    %22 = vst [vmem:[#allocation5] sm:$0xff] %v21
    %v23 = vand.u32 2147483647, %v21
    %vm24 = vcmp.le.f32.partialorder %v23, 0.7853982
    %vm25 = vcmp.lt.s32.totalorder %v21, 0
    %v26 = vand.u32 %v21, 2139095040
    %v27 = vshrl.u32 %v26, 23
    %v28 = vsub.s32 %v27, 127
    %v29 = vand.u32 2147483647, %v21
    %v30 = vand.u32 %v29, 8388607
    %v31 = vor.u32 %v30, 8388608
    %v32 = vsub.s32 0, %v31
    %v33 = vadd.s32 %v28, 1
    %vm34 = vcmp.gt.s32.totalorder %v33, 0
    %v35 = vsel %vm34, %v33, 0
    %v36 = vshrl.u32 %v35, 5
    %v37 = vand.u32 %v35, 31
    %v38 = vsub.s32 32, %v37
    %v39 = vshrl.u32 683565275, %v38
    %v40 = vshll.u32 683565275, %v37
    %v41 = vshrl.u32 2475754826, %v38
    %v42 = vor.u32 %v40, %v41
    %v43 = vshll.u32 2475754826, %v37
    %v44 = vshrl.u32 2131351028, %v38
    %v45 = vor.u32 %v43, %v44
    %v46 = vshll.u32 2131351028, %v37
    %v47 = vshrl.u32 2102212464, %v38
    %v48 = vor.u32 %v46, %v47
    %v49 = vshll.u32 2102212464, %v37
    %v50 = vshrl.u32 920167782, %v38
    %v51 = vor.u32 %v49, %v50
    %v52 = vshll.u32 920167782, %v37
    %v53 = vshrl.u32 1326507024, %v38
    %v54 = vor.u32 %v52, %v53
    %vm55 = vcmp.lt.s32.totalorder %v36, 1
    %vm56 = vcmp.lt.s32.totalorder %v36, 2
    %vm57 = vcmp.lt.s32.totalorder %v36, 3
    %vm58 = vcmp.lt.s32.totalorder %v36, 4
    %v59 = vsel %vm55, %v39, %v42
    %v60 = vsel %vm58, %v48, 2102212464
    %v61 = vsel %vm57, %v45, %v60
    %v62 = vsel %vm56, %v59, %v61
    %v63 = vsel %vm55, %v42, %v45
    %v64 = vsel %vm58, %v51, 920167782
    %v65 = vsel %vm57, %v48, %v64
    %v66 = vsel %vm56, %v63, %v65
    %v67 = vsel %vm55, %v45, %v48
    %v68 = vsel %vm58, %v54, 1326507024
    %v69 = vsel %vm57, %v51, %v68
    %v70 = vsel %vm56, %v67, %v69
    %v71 = vshll.u32 %v31, 8
    %v72 = vmul.u32.u64.compose %v71, %v70
    %v73 = vextract.low.u32 %v72
    %v74 = vextract.high.u32 %v72
    %v75 = vmul.u32.u64.compose %v71, %v66
    %v76 = vextract.low.u32 %v75
    %v77 = vextract.high.u32 %v75
    %v78 = vmul.u32 %v71, %v62
    %v79 = vadd.s32 %v74, %v76
    %vm80 = vc.u32 %v74, %v76
    %v81 = vadd.s32 %v77, 1
    %v82 = vsel %vm80, %v81, %v77
    %v83 = vadd.s32 %v78, %v82
    %v84 = vadd.s32 %v83, 536870912
    %v85 = vshrl.u32 %v84, 30
    %v86 = vshll.u32 %v85, 30
    %v87 = vsub.s32 %v83, %v86
    %vm88 = vcmp.lt.s32.totalorder %v87, 0
    %v89 = vsub.s32 0, %v87
    %v90 = vsel %vm88, %v89, %v87
    %v91 = vclz %v90
    %v92 = vsub.s32 %v91, 2
    %vm93 = vcmp.gt.s32.totalorder 0, %v92
    %v94 = vsel %vm93, 0, %v92
    %v95 = vsub.s32 32, %v94
    %v96 = vshll.u32 %v87, %v94
    %v97 = vshrl.u32 %v79, %v95
    %v98 = vor.u32 %v96, %v97
    %v99 = vsub.s32 4294967266, %v94
    %v100 = vadd.s32 %v99, 127
    %v101 = vshll.u32 %v100, 23
    %v102 = vor.u32 4788187, %v101
    %v103 = vand.u32 2147483647, %v102
    %v105 = vcvt.s32.f32 %v98
    %v106 = vmul.f32 %v105, %v103
    %v107 = vxor.u32 %v106, 2147483648
    %v108 = vsel %vm25, %v107, %v106
    %v109 = vsub.s32 4, %v85
    %v110 = vsel %vm25, %v109, %v85
    %v111 = vsel %vm24, %v21, %v108
    %v112 = vsel %vm24, 0, %v110
    %v113 = vcosq.f32.pop %v111
    %v114 = vsinq.f32.pop %v111
    %vm115 = vweird.f32 %v21
    %v116 = vadd.s32 %v112, 3
    %v117 = vand.u32 %v116, 3
    %vm118 = vcmp.lt.s32.totalorder %v117, 2
    %vm119 = vcmp.eq.s32.totalorder %v117, 0
    %v120 = vxor.u32 %v114, 2147483648
    %v121 = vsel %vm119, %v113, %v120
    %vm122 = vcmp.eq.s32.totalorder %v117, 2
    %v123 = vxor.u32 %v113, 2147483648
    %v124 = vsel %vm122, %v123, %v114
    %v125 = vsel %vm118, %v121, %v124
    %v126 = vsel %vm115, nan, %v125
    %s127 = scalar_lea.vmem [#allocation5], 8
    %128 = vst [vmem:[%s127] sm:$0xff] %v126
    %v129 = vand.u32 2147483647, %v21
    %vm130 = vcmp.le.f32.partialorder %v129, 0.7853982
    %vm131 = vcmp.lt.s32.totalorder %v21, 0
    %v132 = vand.u32 %v21, 2139095040
    %v133 = vshrl.u32 %v132, 23
    %v134 = vsub.s32 %v133, 127
    %v135 = vand.u32 2147483647, %v21
    %v136 = vand.u32 %v135, 8388607
    %v137 = vor.u32 %v136, 8388608
    %v138 = vsub.s32 0, %v137
    %v139 = vadd.s32 %v134, 1
    %vm140 = vcmp.gt.s32.totalorder %v139, 0
    %v141 = vsel %vm140, %v139, 0
    %v142 = vshrl.u32 %v141, 5
    %v143 = vand.u32 %v141, 31
    %v144 = vsub.s32 32, %v143
    %v145 = vshrl.u32 683565275, %v144
    %v146 = vshll.u32 683565275, %v143
    %v147 = vshrl.u32 2475754826, %v144
    %v148 = vor.u32 %v146, %v147
    %v149 = vshll.u32 2475754826, %v143
    %v150 = vshrl.u32 2131351028, %v144
    %v151 = vor.u32 %v149, %v150
    %v152 = vshll.u32 2131351028, %v143
    %v153 = vshrl.u32 2102212464, %v144
    %v154 = vor.u32 %v152, %v153
    %v155 = vshll.u32 2102212464, %v143
    %v156 = vshrl.u32 920167782, %v144
    %v157 = vor.u32 %v155, %v156
    %v158 = vshll.u32 920167782, %v143
    %v159 = vshrl.u32 1326507024, %v144
    %v160 = vor.u32 %v158, %v159
    %vm161 = vcmp.lt.s32.totalorder %v142, 1
    %vm162 = vcmp.lt.s32.totalorder %v142, 2
    %vm163 = vcmp.lt.s32.totalorder %v142, 3
    %vm164 = vcmp.lt.s32.totalorder %v142, 4
    %v165 = vsel %vm161, %v145, %v148
    %v166 = vsel %vm164, %v154, 2102212464
    %v167 = vsel %vm163, %v151, %v166
    %v168 = vsel %vm162, %v165, %v167
    %v169 = vsel %vm161, %v148, %v151
    %v170 = vsel %vm164, %v157, 920167782
    %v171 = vsel %vm163, %v154, %v170
    %v172 = vsel %vm162, %v169, %v171
    %v173 = vsel %vm161, %v151, %v154
    %v174 = vsel %vm164, %v160, 1326507024
    %v175 = vsel %vm163, %v157, %v174
    %v176 = vsel %vm162, %v173, %v175
    %v177 = vshll.u32 %v137, 8
    %v178 = vmul.u32.u64.compose %v177, %v176
    %v179 = vextract.low.u32 %v178
    %v180 = vextract.high.u32 %v178
    %v181 = vmul.u32.u64.compose %v177, %v172
    %v182 = vextract.low.u32 %v181
    %v183 = vextract.high.u32 %v181
    %v184 = vmul.u32 %v177, %v168
    %v185 = vadd.s32 %v180, %v182
    %vm186 = vc.u32 %v180, %v182
    %v187 = vadd.s32 %v183, 1
    %v188 = vsel %vm186, %v187, %v183
    %v189 = vadd.s32 %v184, %v188
    %v190 = vadd.s32 %v189, 536870912
    %v191 = vshrl.u32 %v190, 30
    %v192 = vshll.u32 %v191, 30
    %v193 = vsub.s32 %v189, %v192
    %vm194 = vcmp.lt.s32.totalorder %v193, 0
    %v195 = vsub.s32 0, %v193
    %v196 = vsel %vm194, %v195, %v193
    %v197 = vclz %v196
    %v198 = vsub.s32 %v197, 2
    %vm199 = vcmp.gt.s32.totalorder 0, %v198
    %v200 = vsel %vm199, 0, %v198
    %v201 = vsub.s32 32, %v200
    %v202 = vshll.u32 %v193, %v200
    %v203 = vshrl.u32 %v185, %v201
    %v204 = vor.u32 %v202, %v203
    %v205 = vsub.s32 4294967266, %v200
    %v206 = vadd.s32 %v205, 127
    %v207 = vshll.u32 %v206, 23
    %v208 = vor.u32 4788187, %v207
    %v209 = vand.u32 2147483647, %v208
    %v211 = vcvt.s32.f32 %v204
    %v212 = vmul.f32 %v211, %v209
    %v213 = vxor.u32 %v212, 2147483648
    %v214 = vsel %vm131, %v213, %v212
    %v215 = vsub.s32 4, %v191
    %v216 = vsel %vm131, %v215, %v191
    %v217 = vsel %vm130, %v21, %v214
    %v218 = vsel %vm130, 0, %v216
    %v219 = vcosq.f32.pop %v217
    %v220 = vsinq.f32.pop %v217
    %vm221 = vweird.f32 %v21
    %v222 = vand.u32 %v218, 3
    %vm223 = vcmp.lt.s32.totalorder %v222, 2
    %vm224 = vcmp.eq.s32.totalorder %v222, 0
    %v225 = vxor.u32 %v220, 2147483648
    %v226 = vsel %vm224, %v219, %v225
    %vm227 = vcmp.eq.s32.totalorder %v222, 2
    %v228 = vxor.u32 %v219, 2147483648
    %v229 = vsel %vm227, %v228, %v220
    %v230 = vsel %vm223, %v226, %v229
    %v231 = vsel %vm221, nan, %v230
    %s232 = scalar_lea.vmem [#allocation5], 16
    %233 = vst [vmem:[%s232] sm:$0xff] %v231
    %v234 = vmul.f32 %v21, 2.0
    %v235 = vand.u32 2147483647, %v234
    %vm236 = vcmp.le.f32.partialorder %v235, 0.7853982
    %vm237 = vcmp.lt.s32.totalorder %v234, 0
    %v238 = vand.u32 %v234, 2139095040
    %v239 = vshrl.u32 %v238, 23
    %v240 = vsub.s32 %v239, 127
    %v241 = vand.u32 2147483647, %v234
    %v242 = vand.u32 %v241, 8388607
    %v243 = vor.u32 %v242, 8388608
    %v244 = vsub.s32 0, %v243
    %v245 = vadd.s32 %v240, 1
    %vm246 = vcmp.gt.s32.totalorder %v245, 0
    %v247 = vsel %vm246, %v245, 0
    %v248 = vshrl.u32 %v247, 5
    %v249 = vand.u32 %v247, 31
    %v250 = vsub.s32 32, %v249
    %v251 = vshrl.u32 683565275, %v250
    %v252 = vshll.u32 683565275, %v249
    %v253 = vshrl.u32 2475754826, %v250
    %v254 = vor.u32 %v252, %v253
    %v255 = vshll.u32 2475754826, %v249
    %v256 = vshrl.u32 2131351028, %v250
    %v257 = vor.u32 %v255, %v256
    %v258 = vshll.u32 2131351028, %v249
    %v259 = vshrl.u32 2102212464, %v250
    %v260 = vor.u32 %v258, %v259
    %v261 = vshll.u32 2102212464, %v249
    %v262 = vshrl.u32 920167782, %v250
    %v263 = vor.u32 %v261, %v262
    %v264 = vshll.u32 920167782, %v249
    %v265 = vshrl.u32 1326507024, %v250
    %v266 = vor.u32 %v264, %v265
    %vm267 = vcmp.lt.s32.totalorder %v248, 1
    %vm268 = vcmp.lt.s32.totalorder %v248, 2
    %vm269 = vcmp.lt.s32.totalorder %v248, 3
    %vm270 = vcmp.lt.s32.totalorder %v248, 4
    %v271 = vsel %vm267, %v251, %v254
    %v272 = vsel %vm270, %v260, 2102212464
    %v273 = vsel %vm269, %v257, %v272
    %v274 = vsel %vm268, %v271, %v273
    %v275 = vsel %vm267, %v254, %v257
    %v276 = vsel %vm270, %v263, 920167782
    %v277 = vsel %vm269, %v260, %v276
    %v278 = vsel %vm268, %v275, %v277
    %v279 = vsel %vm267, %v257, %v260
    %v280 = vsel %vm270, %v266, 1326507024
    %v281 = vsel %vm269, %v263, %v280
    %v282 = vsel %vm268, %v279, %v281
    %v283 = vshll.u32 %v243, 8
    %v284 = vmul.u32.u64.compose %v283, %v282
    %v285 = vextract.low.u32 %v284
    %v286 = vextract.high.u32 %v284
    %v287 = vmul.u32.u64.compose %v283, %v278
    %v288 = vextract.low.u32 %v287
    %v289 = vextract.high.u32 %v287
    %v290 = vmul.u32 %v283, %v274
    %v291 = vadd.s32 %v286, %v288
    %vm292 = vc.u32 %v286, %v288
    %v293 = vadd.s32 %v289, 1
    %v294 = vsel %vm292, %v293, %v289
    %v295 = vadd.s32 %v290, %v294
    %v296 = vadd.s32 %v295, 536870912
    %v297 = vshrl.u32 %v296, 30
    %v298 = vshll.u32 %v297, 30
    %v299 = vsub.s32 %v295, %v298
    %vm300 = vcmp.lt.s32.totalorder %v299, 0
    %v301 = vsub.s32 0, %v299
    %v302 = vsel %vm300, %v301, %v299
    %v303 = vclz %v302
    %v304 = vsub.s32 %v303, 2
    %vm305 = vcmp.gt.s32.totalorder 0, %v304
    %v306 = vsel %vm305, 0, %v304
    %v307 = vsub.s32 32, %v306
    %v308 = vshll.u32 %v299, %v306
    %v309 = vshrl.u32 %v291, %v307
    %v310 = vor.u32 %v308, %v309
    %v311 = vsub.s32 4294967266, %v306
    %v312 = vadd.s32 %v311, 127
    %v313 = vshll.u32 %v312, 23
    %v314 = vor.u32 4788187, %v313
    %v315 = vand.u32 2147483647, %v314
    %v317 = vcvt.s32.f32 %v310
    %v318 = vmul.f32 %v317, %v315
    %v319 = vxor.u32 %v318, 2147483648
    %v320 = vsel %vm237, %v319, %v318
    %v321 = vsub.s32 4, %v297
    %v322 = vsel %vm237, %v321, %v297
    %v323 = vsel %vm236, %v234, %v320
    %v324 = vsel %vm236, 0, %v322
    %v325 = vcosq.f32.pop %v323
    %v326 = vsinq.f32.pop %v323
    %vm327 = vweird.f32 %v234
    %v328 = vadd.s32 %v324, 3
    %v329 = vand.u32 %v328, 3
    %vm330 = vcmp.lt.s32.totalorder %v329, 2
    %vm331 = vcmp.eq.s32.totalorder %v329, 0
    %v332 = vxor.u32 %v326, 2147483648
    %v333 = vsel %vm331, %v325, %v332
    %vm334 = vcmp.eq.s32.totalorder %v329, 2
    %v335 = vxor.u32 %v325, 2147483648
    %v336 = vsel %vm334, %v335, %v326
    %v337 = vsel %vm330, %v333, %v336
    %v338 = vsel %vm327, nan, %v337
    %s339 = scalar_lea.vmem [#allocation5], 24
    %340 = vst [vmem:[%s339] sm:$0xff] %v338
    %v341 = vand.u32 2147483647, %v234
    %vm342 = vcmp.le.f32.partialorder %v341, 0.7853982
    %vm343 = vcmp.lt.s32.totalorder %v234, 0
    %v344 = vand.u32 %v234, 2139095040
    %v345 = vshrl.u32 %v344, 23
    %v346 = vsub.s32 %v345, 127
    %v347 = vand.u32 2147483647, %v234
    %v348 = vand.u32 %v347, 8388607
    %v349 = vor.u32 %v348, 8388608
    %v350 = vsub.s32 0, %v349
    %v351 = vadd.s32 %v346, 1
    %vm352 = vcmp.gt.s32.totalorder %v351, 0
    %v353 = vsel %vm352, %v351, 0
    %v354 = vshrl.u32 %v353, 5
    %v355 = vand.u32 %v353, 31
    %v356 = vsub.s32 32, %v355
    %v357 = vshrl.u32 683565275, %v356
    %v358 = vshll.u32 683565275, %v355
    %v359 = vshrl.u32 2475754826, %v356
    %v360 = vor.u32 %v358, %v359
    %v361 = vshll.u32 2475754826, %v355
    %v362 = vshrl.u32 2131351028, %v356
    %v363 = vor.u32 %v361, %v362
    %v364 = vshll.u32 2131351028, %v355
    %v365 = vshrl.u32 2102212464, %v356
    %v366 = vor.u32 %v364, %v365
    %v367 = vshll.u32 2102212464, %v355
    %v368 = vshrl.u32 920167782, %v356
    %v369 = vor.u32 %v367, %v368
    %v370 = vshll.u32 920167782, %v355
    %v371 = vshrl.u32 1326507024, %v356
    %v372 = vor.u32 %v370, %v371
    %vm373 = vcmp.lt.s32.totalorder %v354, 1
    %vm374 = vcmp.lt.s32.totalorder %v354, 2
    %vm375 = vcmp.lt.s32.totalorder %v354, 3
    %vm376 = vcmp.lt.s32.totalorder %v354, 4
    %v377 = vsel %vm373, %v357, %v360
    %v378 = vsel %vm376, %v366, 2102212464
    %v379 = vsel %vm375, %v363, %v378
    %v380 = vsel %vm374, %v377, %v379
    %v381 = vsel %vm373, %v360, %v363
    %v382 = vsel %vm376, %v369, 920167782
    %v383 = vsel %vm375, %v366, %v382
    %v384 = vsel %vm374, %v381, %v383
    %v385 = vsel %vm373, %v363, %v366
    %v386 = vsel %vm376, %v372, 1326507024
    %v387 = vsel %vm375, %v369, %v386
    %v388 = vsel %vm374, %v385, %v387
    %v389 = vshll.u32 %v349, 8
    %v390 = vmul.u32.u64.compose %v389, %v388
    %v391 = vextract.low.u32 %v390
    %v392 = vextract.high.u32 %v390
    %v393 = vmul.u32.u64.compose %v389, %v384
    %v394 = vextract.low.u32 %v393
    %v395 = vextract.high.u32 %v393
    %v396 = vmul.u32 %v389, %v380
    %v397 = vadd.s32 %v392, %v394
    %vm398 = vc.u32 %v392, %v394
    %v399 = vadd.s32 %v395, 1
    %v400 = vsel %vm398, %v399, %v395
    %v401 = vadd.s32 %v396, %v400
    %v402 = vadd.s32 %v401, 536870912
    %v403 = vshrl.u32 %v402, 30
    %v404 = vshll.u32 %v403, 30
    %v405 = vsub.s32 %v401, %v404
    %vm406 = vcmp.lt.s32.totalorder %v405, 0
    %v407 = vsub.s32 0, %v405
    %v408 = vsel %vm406, %v407, %v405
    %v409 = vclz %v408
    %v410 = vsub.s32 %v409, 2
    %vm411 = vcmp.gt.s32.totalorder 0, %v410
    %v412 = vsel %vm411, 0, %v410
    %v413 = vsub.s32 32, %v412
    %v414 = vshll.u32 %v405, %v412
    %v415 = vshrl.u32 %v397, %v413
    %v416 = vor.u32 %v414, %v415
    %v417 = vsub.s32 4294967266, %v412
    %v418 = vadd.s32 %v417, 127
    %v419 = vshll.u32 %v418, 23
    %v420 = vor.u32 4788187, %v419
    %v421 = vand.u32 2147483647, %v420
    %v423 = vcvt.s32.f32 %v416
    %v424 = vmul.f32 %v423, %v421
    %v425 = vxor.u32 %v424, 2147483648
    %v426 = vsel %vm343, %v425, %v424
    %v427 = vsub.s32 4, %v403
    %v428 = vsel %vm343, %v427, %v403
    %v429 = vsel %vm342, %v234, %v426
    %v430 = vsel %vm342, 0, %v428
    %v431 = vcosq.f32.pop %v429
    %v432 = vsinq.f32.pop %v429
    %vm433 = vweird.f32 %v234
    %v434 = vand.u32 %v430, 3
    %vm435 = vcmp.lt.s32.totalorder %v434, 2
    %vm436 = vcmp.eq.s32.totalorder %v434, 0
    %v437 = vxor.u32 %v432, 2147483648
    %v438 = vsel %vm436, %v431, %v437
    %vm439 = vcmp.eq.s32.totalorder %v434, 2
    %v440 = vxor.u32 %v431, 2147483648
    %v441 = vsel %vm439, %v440, %v432
    %v442 = vsel %vm435, %v438, %v441
    %v443 = vsel %vm433, nan, %v442
    %s444 = scalar_lea.vmem [#allocation5], 32
    %445 = vst [vmem:[%s444] sm:$0xff] %v443
    %v446 = vmul.f32 %v21, 4.0
    %v447 = vand.u32 2147483647, %v446
    %vm448 = vcmp.le.f32.partialorder %v447, 0.7853982
    %vm449 = vcmp.lt.s32.totalorder %v446, 0
    %v450 = vand.u32 %v446, 2139095040
    %v451 = vshrl.u32 %v450, 23
    %v452 = vsub.s32 %v451, 127
    %v453 = vand.u32 2147483647, %v446
    %v454 = vand.u32 %v453, 8388607
    %v455 = vor.u32 %v454, 8388608
    %v456 = vsub.s32 0, %v455
    %v457 = vadd.s32 %v452, 1
    %vm458 = vcmp.gt.s32.totalorder %v457, 0
    %v459 = vsel %vm458, %v457, 0
    %v460 = vshrl.u32 %v459, 5
    %v461 = vand.u32 %v459, 31
    %v462 = vsub.s32 32, %v461
    %v463 = vshrl.u32 683565275, %v462
    %v464 = vshll.u32 683565275, %v461
    %v465 = vshrl.u32 2475754826, %v462
    %v466 = vor.u32 %v464, %v465
    %v467 = vshll.u32 2475754826, %v461
    %v468 = vshrl.u32 2131351028, %v462
    %v469 = vor.u32 %v467, %v468
    %v470 = vshll.u32 2131351028, %v461
    %v471 = vshrl.u32 2102212464, %v462
    %v472 = vor.u32 %v470, %v471
    %v473 = vshll.u32 2102212464, %v461
    %v474 = vshrl.u32 920167782, %v462
    %v475 = vor.u32 %v473, %v474
    %v476 = vshll.u32 920167782, %v461
    %v477 = vshrl.u32 1326507024, %v462
    %v478 = vor.u32 %v476, %v477
    %vm479 = vcmp.lt.s32.totalorder %v460, 1
    %vm480 = vcmp.lt.s32.totalorder %v460, 2
    %vm481 = vcmp.lt.s32.totalorder %v460, 3
    %vm482 = vcmp.lt.s32.totalorder %v460, 4
    %v483 = vsel %vm479, %v463, %v466
    %v484 = vsel %vm482, %v472, 2102212464
    %v485 = vsel %vm481, %v469, %v484
    %v486 = vsel %vm480, %v483, %v485
    %v487 = vsel %vm479, %v466, %v469
    %v488 = vsel %vm482, %v475, 920167782
    %v489 = vsel %vm481, %v472, %v488
    %v490 = vsel %vm480, %v487, %v489
    %v491 = vsel %vm479, %v469, %v472
    %v492 = vsel %vm482, %v478, 1326507024
    %v493 = vsel %vm481, %v475, %v492
    %v494 = vsel %vm480, %v491, %v493
    %v495 = vshll.u32 %v455, 8
    %v496 = vmul.u32.u64.compose %v495, %v494
    %v497 = vextract.low.u32 %v496
    %v498 = vextract.high.u32 %v496
    %v499 = vmul.u32.u64.compose %v495, %v490
    %v500 = vextract.low.u32 %v499
    %v501 = vextract.high.u32 %v499
    %v502 = vmul.u32 %v495, %v486
    %v503 = vadd.s32 %v498, %v500
    %vm504 = vc.u32 %v498, %v500
    %v505 = vadd.s32 %v501, 1
    %v506 = vsel %vm504, %v505, %v501
    %v507 = vadd.s32 %v502, %v506
    %v508 = vadd.s32 %v507, 536870912
    %v509 = vshrl.u32 %v508, 30
    %v510 = vshll.u32 %v509, 30
    %v511 = vsub.s32 %v507, %v510
    %vm512 = vcmp.lt.s32.totalorder %v511, 0
    %v513 = vsub.s32 0, %v511
    %v514 = vsel %vm512, %v513, %v511
    %v515 = vclz %v514
    %v516 = vsub.s32 %v515, 2
    %vm517 = vcmp.gt.s32.totalorder 0, %v516
    %v518 = vsel %vm517, 0, %v516
    %v519 = vsub.s32 32, %v518
    %v520 = vshll.u32 %v511, %v518
    %v521 = vshrl.u32 %v503, %v519
    %v522 = vor.u32 %v520, %v521
    %v523 = vsub.s32 4294967266, %v518
    %v524 = vadd.s32 %v523, 127
    %v525 = vshll.u32 %v524, 23
    %v526 = vor.u32 4788187, %v525
    %v527 = vand.u32 2147483647, %v526
    %v529 = vcvt.s32.f32 %v522
    %v530 = vmul.f32 %v529, %v527
    %v531 = vxor.u32 %v530, 2147483648
    %v532 = vsel %vm449, %v531, %v530
    %v533 = vsub.s32 4, %v509
    %v534 = vsel %vm449, %v533, %v509
    %v535 = vsel %vm448, %v446, %v532
    %v536 = vsel %vm448, 0, %v534
    %v537 = vcosq.f32.pop %v535
    %v538 = vsinq.f32.pop %v535
    %vm539 = vweird.f32 %v446
    %v540 = vadd.s32 %v536, 3
    %v541 = vand.u32 %v540, 3
    %vm542 = vcmp.lt.s32.totalorder %v541, 2
    %vm543 = vcmp.eq.s32.totalorder %v541, 0
    %v544 = vxor.u32 %v538, 2147483648
    %v545 = vsel %vm543, %v537, %v544
    %vm546 = vcmp.eq.s32.totalorder %v541, 2
    %v547 = vxor.u32 %v537, 2147483648
    %v548 = vsel %vm546, %v547, %v538
    %v549 = vsel %vm542, %v545, %v548
    %v550 = vsel %vm539, nan, %v549
    %s551 = scalar_lea.vmem [#allocation5], 40
    %552 = vst [vmem:[%s551] sm:$0xff] %v550
    %v553 = vand.u32 2147483647, %v446
    %vm554 = vcmp.le.f32.partialorder %v553, 0.7853982
    %vm555 = vcmp.lt.s32.totalorder %v446, 0
    %v556 = vand.u32 %v446, 2139095040
    %v557 = vshrl.u32 %v556, 23
    %v558 = vsub.s32 %v557, 127
    %v559 = vand.u32 2147483647, %v446
    %v560 = vand.u32 %v559, 8388607
    %v561 = vor.u32 %v560, 8388608
    %v562 = vsub.s32 0, %v561
    %v563 = vadd.s32 %v558, 1
    %vm564 = vcmp.gt.s32.totalorder %v563, 0
    %v565 = vsel %vm564, %v563, 0
    %v566 = vshrl.u32 %v565, 5
    %v567 = vand.u32 %v565, 31
    %v568 = vsub.s32 32, %v567
    %v569 = vshrl.u32 683565275, %v568
    %v570 = vshll.u32 683565275, %v567
    %v571 = vshrl.u32 2475754826, %v568
    %v572 = vor.u32 %v570, %v571
    %v573 = vshll.u32 2475754826, %v567
    %v574 = vshrl.u32 2131351028, %v568
    %v575 = vor.u32 %v573, %v574
    %v576 = vshll.u32 2131351028, %v567
    %v577 = vshrl.u32 2102212464, %v568
    %v578 = vor.u32 %v576, %v577
    %v579 = vshll.u32 2102212464, %v567
    %v580 = vshrl.u32 920167782, %v568
    %v581 = vor.u32 %v579, %v580
    %v582 = vshll.u32 920167782, %v567
    %v583 = vshrl.u32 1326507024, %v568
    %v584 = vor.u32 %v582, %v583
    %vm585 = vcmp.lt.s32.totalorder %v566, 1
    %vm586 = vcmp.lt.s32.totalorder %v566, 2
    %vm587 = vcmp.lt.s32.totalorder %v566, 3
    %vm588 = vcmp.lt.s32.totalorder %v566, 4
    %v589 = vsel %vm585, %v569, %v572
    %v590 = vsel %vm588, %v578, 2102212464
    %v591 = vsel %vm587, %v575, %v590
    %v592 = vsel %vm586, %v589, %v591
    %v593 = vsel %vm585, %v572, %v575
    %v594 = vsel %vm588, %v581, 920167782
    %v595 = vsel %vm587, %v578, %v594
    %v596 = vsel %vm586, %v593, %v595
    %v597 = vsel %vm585, %v575, %v578
    %v598 = vsel %vm588, %v584, 1326507024
    %v599 = vsel %vm587, %v581, %v598
    %v600 = vsel %vm586, %v597, %v599
    %v601 = vshll.u32 %v561, 8
    %v602 = vmul.u32.u64.compose %v601, %v600
    %v603 = vextract.low.u32 %v602
    %v604 = vextract.high.u32 %v602
    %v605 = vmul.u32.u64.compose %v601, %v596
    %v606 = vextract.low.u32 %v605
    %v607 = vextract.high.u32 %v605
    %v608 = vmul.u32 %v601, %v592
    %v609 = vadd.s32 %v604, %v606
    %vm610 = vc.u32 %v604, %v606
    %v611 = vadd.s32 %v607, 1
    %v612 = vsel %vm610, %v611, %v607
    %v613 = vadd.s32 %v608, %v612
    %v614 = vadd.s32 %v613, 536870912
    %v615 = vshrl.u32 %v614, 30
    %v616 = vshll.u32 %v615, 30
    %v617 = vsub.s32 %v613, %v616
    %vm618 = vcmp.lt.s32.totalorder %v617, 0
    %v619 = vsub.s32 0, %v617
    %v620 = vsel %vm618, %v619, %v617
    %v621 = vclz %v620
    %v622 = vsub.s32 %v621, 2
    %vm623 = vcmp.gt.s32.totalorder 0, %v622
    %v624 = vsel %vm623, 0, %v622
    %v625 = vsub.s32 32, %v624
    %v626 = vshll.u32 %v617, %v624
    %v627 = vshrl.u32 %v609, %v625
    %v628 = vor.u32 %v626, %v627
    %v629 = vsub.s32 4294967266, %v624
    %v630 = vadd.s32 %v629, 127
    %v631 = vshll.u32 %v630, 23
    %v632 = vor.u32 4788187, %v631
    %v633 = vand.u32 2147483647, %v632
    %v635 = vcvt.s32.f32 %v628
    %v636 = vmul.f32 %v635, %v633
    %v637 = vxor.u32 %v636, 2147483648
    %v638 = vsel %vm555, %v637, %v636
    %v639 = vsub.s32 4, %v615
    %v640 = vsel %vm555, %v639, %v615
    %v641 = vsel %vm554, %v446, %v638
    %v642 = vsel %vm554, 0, %v640
    %v643 = vcosq.f32.pop %v641
    %v644 = vsinq.f32.pop %v641
    %vm645 = vweird.f32 %v446
    %v646 = vand.u32 %v642, 3
    %vm647 = vcmp.lt.s32.totalorder %v646, 2
    %vm648 = vcmp.eq.s32.totalorder %v646, 0
    %v649 = vxor.u32 %v644, 2147483648
    %v650 = vsel %vm648, %v643, %v649
    %vm651 = vcmp.eq.s32.totalorder %v646, 2
    %v652 = vxor.u32 %v643, 2147483648
    %v653 = vsel %vm651, %v652, %v644
    %v654 = vsel %vm647, %v650, %v653
    %v655 = vsel %vm645, nan, %v654
    %s656 = scalar_lea.vmem [#allocation5], 48
    %657 = vst [vmem:[%s656] sm:$0xff] %v655
    %v658 = vmul.f32 %v21, 8.0
    %v659 = vand.u32 2147483647, %v658
    %vm660 = vcmp.le.f32.partialorder %v659, 0.7853982
    %vm661 = vcmp.lt.s32.totalorder %v658, 0
    %v662 = vand.u32 %v658, 2139095040
    %v663 = vshrl.u32 %v662, 23
    %v664 = vsub.s32 %v663, 127
    %v665 = vand.u32 2147483647, %v658
    %v666 = vand.u32 %v665, 8388607
    %v667 = vor.u32 %v666, 8388608
    %v668 = vsub.s32 0, %v667
    %v669 = vadd.s32 %v664, 1
    %vm670 = vcmp.gt.s32.totalorder %v669, 0
    %v671 = vsel %vm670, %v669, 0
    %v672 = vshrl.u32 %v671, 5
    %v673 = vand.u32 %v671, 31
    %v674 = vsub.s32 32, %v673
    %v675 = vshrl.u32 683565275, %v674
    %v676 = vshll.u32 683565275, %v673
    %v677 = vshrl.u32 2475754826, %v674
    %v678 = vor.u32 %v676, %v677
    %v679 = vshll.u32 2475754826, %v673
    %v680 = vshrl.u32 2131351028, %v674
    %v681 = vor.u32 %v679, %v680
    %v682 = vshll.u32 2131351028, %v673
    %v683 = vshrl.u32 2102212464, %v674
    %v684 = vor.u32 %v682, %v683
    %v685 = vshll.u32 2102212464, %v673
    %v686 = vshrl.u32 920167782, %v674
    %v687 = vor.u32 %v685, %v686
    %v688 = vshll.u32 920167782, %v673
    %v689 = vshrl.u32 1326507024, %v674
    %v690 = vor.u32 %v688, %v689
    %vm691 = vcmp.lt.s32.totalorder %v672, 1
    %vm692 = vcmp.lt.s32.totalorder %v672, 2
    %vm693 = vcmp.lt.s32.totalorder %v672, 3
    %vm694 = vcmp.lt.s32.totalorder %v672, 4
    %v695 = vsel %vm691, %v675, %v678
    %v696 = vsel %vm694, %v684, 2102212464
    %v697 = vsel %vm693, %v681, %v696
    %v698 = vsel %vm692, %v695, %v697
    %v699 = vsel %vm691, %v678, %v681
    %v700 = vsel %vm694, %v687, 920167782
    %v701 = vsel %vm693, %v684, %v700
    %v702 = vsel %vm692, %v699, %v701
    %v703 = vsel %vm691, %v681, %v684
    %v704 = vsel %vm694, %v690, 1326507024
    %v705 = vsel %vm693, %v687, %v704
    %v706 = vsel %vm692, %v703, %v705
    %v707 = vshll.u32 %v667, 8
    %v708 = vmul.u32.u64.compose %v707, %v706
    %v709 = vextract.low.u32 %v708
    %v710 = vextract.high.u32 %v708
    %v711 = vmul.u32.u64.compose %v707, %v702
    %v712 = vextract.low.u32 %v711
    %v713 = vextract.high.u32 %v711
    %v714 = vmul.u32 %v707, %v698
    %v715 = vadd.s32 %v710, %v712
    %vm716 = vc.u32 %v710, %v712
    %v717 = vadd.s32 %v713, 1
    %v718 = vsel %vm716, %v717, %v713
    %v719 = vadd.s32 %v714, %v718
    %v720 = vadd.s32 %v719, 536870912
    %v721 = vshrl.u32 %v720, 30
    %v722 = vshll.u32 %v721, 30
    %v723 = vsub.s32 %v719, %v722
    %vm724 = vcmp.lt.s32.totalorder %v723, 0
    %v725 = vsub.s32 0, %v723
    %v726 = vsel %vm724, %v725, %v723
    %v727 = vclz %v726
    %v728 = vsub.s32 %v727, 2
    %vm729 = vcmp.gt.s32.totalorder 0, %v728
    %v730 = vsel %vm729, 0, %v728
    %v731 = vsub.s32 32, %v730
    %v732 = vshll.u32 %v723, %v730
    %v733 = vshrl.u32 %v715, %v731
    %v734 = vor.u32 %v732, %v733
    %v735 = vsub.s32 4294967266, %v730
    %v736 = vadd.s32 %v735, 127
    %v737 = vshll.u32 %v736, 23
    %v738 = vor.u32 4788187, %v737
    %v739 = vand.u32 2147483647, %v738
    %v741 = vcvt.s32.f32 %v734
    %v742 = vmul.f32 %v741, %v739
    %v743 = vxor.u32 %v742, 2147483648
    %v744 = vsel %vm661, %v743, %v742
    %v745 = vsub.s32 4, %v721
    %v746 = vsel %vm661, %v745, %v721
    %v747 = vsel %vm660, %v658, %v744
    %v748 = vsel %vm660, 0, %v746
    %v749 = vcosq.f32.pop %v747
    %v750 = vsinq.f32.pop %v747
    %vm751 = vweird.f32 %v658
    %v752 = vadd.s32 %v748, 3
    %v753 = vand.u32 %v752, 3
    %vm754 = vcmp.lt.s32.totalorder %v753, 2
    %vm755 = vcmp.eq.s32.totalorder %v753, 0
    %v756 = vxor.u32 %v750, 2147483648
    %v757 = vsel %vm755, %v749, %v756
    %vm758 = vcmp.eq.s32.totalorder %v753, 2
    %v759 = vxor.u32 %v749, 2147483648
    %v760 = vsel %vm758, %v759, %v750
    %v761 = vsel %vm754, %v757, %v760
    %v762 = vsel %vm751, nan, %v761
    %s763 = scalar_lea.vmem [#allocation5], 56
    %764 = vst [vmem:[%s763] sm:$0xff] %v762
    %v765 = vand.u32 2147483647, %v658
    %vm766 = vcmp.le.f32.partialorder %v765, 0.7853982
    %vm767 = vcmp.lt.s32.totalorder %v658, 0
    %v768 = vand.u32 %v658, 2139095040
    %v769 = vshrl.u32 %v768, 23
    %v770 = vsub.s32 %v769, 127
    %v771 = vand.u32 2147483647, %v658
    %v772 = vand.u32 %v771, 8388607
    %v773 = vor.u32 %v772, 8388608
    %v774 = vsub.s32 0, %v773
    %v775 = vadd.s32 %v770, 1
    %vm776 = vcmp.gt.s32.totalorder %v775, 0
    %v777 = vsel %vm776, %v775, 0
    %v778 = vshrl.u32 %v777, 5
    %v779 = vand.u32 %v777, 31
    %v780 = vsub.s32 32, %v779
    %v781 = vshrl.u32 683565275, %v780
    %v782 = vshll.u32 683565275, %v779
    %v783 = vshrl.u32 2475754826, %v780
    %v784 = vor.u32 %v782, %v783
    %v785 = vshll.u32 2475754826, %v779
    %v786 = vshrl.u32 2131351028, %v780
    %v787 = vor.u32 %v785, %v786
    %v788 = vshll.u32 2131351028, %v779
    %v789 = vshrl.u32 2102212464, %v780
    %v790 = vor.u32 %v788, %v789
    %v791 = vshll.u32 2102212464, %v779
    %v792 = vshrl.u32 920167782, %v780
    %v793 = vor.u32 %v791, %v792
    %v794 = vshll.u32 920167782, %v779
    %v795 = vshrl.u32 1326507024, %v780
    %v796 = vor.u32 %v794, %v795
    %vm797 = vcmp.lt.s32.totalorder %v778, 1
    %vm798 = vcmp.lt.s32.totalorder %v778, 2
    %vm799 = vcmp.lt.s32.totalorder %v778, 3
    %vm800 = vcmp.lt.s32.totalorder %v778, 4
    %v801 = vsel %vm797, %v781, %v784
    %v802 = vsel %vm800, %v790, 2102212464
    %v803 = vsel %vm799, %v787, %v802
    %v804 = vsel %vm798, %v801, %v803
    %v805 = vsel %vm797, %v784, %v787
    %v806 = vsel %vm800, %v793, 920167782
    %v807 = vsel %vm799, %v790, %v806
    %v808 = vsel %vm798, %v805, %v807
    %v809 = vsel %vm797, %v787, %v790
    %v810 = vsel %vm800, %v796, 1326507024
    %v811 = vsel %vm799, %v793, %v810
    %v812 = vsel %vm798, %v809, %v811
    %v813 = vshll.u32 %v773, 8
    %v814 = vmul.u32.u64.compose %v813, %v812
    %v815 = vextract.low.u32 %v814
    %v816 = vextract.high.u32 %v814
    %v817 = vmul.u32.u64.compose %v813, %v808
    %v818 = vextract.low.u32 %v817
    %v819 = vextract.high.u32 %v817
    %v820 = vmul.u32 %v813, %v804
    %v821 = vadd.s32 %v816, %v818
    %vm822 = vc.u32 %v816, %v818
    %v823 = vadd.s32 %v819, 1
    %v824 = vsel %vm822, %v823, %v819
    %v825 = vadd.s32 %v820, %v824
    %v826 = vadd.s32 %v825, 536870912
    %v827 = vshrl.u32 %v826, 30
    %v828 = vshll.u32 %v827, 30
    %v829 = vsub.s32 %v825, %v828
    %vm830 = vcmp.lt.s32.totalorder %v829, 0
    %v831 = vsub.s32 0, %v829
    %v832 = vsel %vm830, %v831, %v829
    %v833 = vclz %v832
    %v834 = vsub.s32 %v833, 2
    %vm835 = vcmp.gt.s32.totalorder 0, %v834
    %v836 = vsel %vm835, 0, %v834
    %v837 = vsub.s32 32, %v836
    %v838 = vshll.u32 %v829, %v836
    %v839 = vshrl.u32 %v821, %v837
    %v840 = vor.u32 %v838, %v839
    %v841 = vsub.s32 4294967266, %v836
    %v842 = vadd.s32 %v841, 127
    %v843 = vshll.u32 %v842, 23
    %v844 = vor.u32 4788187, %v843
    %v845 = vand.u32 2147483647, %v844
    %v847 = vcvt.s32.f32 %v840
    %v848 = vmul.f32 %v847, %v845
    %v849 = vxor.u32 %v848, 2147483648
    %v850 = vsel %vm767, %v849, %v848
    %v851 = vsub.s32 4, %v827
    %v852 = vsel %vm767, %v851, %v827
    %v853 = vsel %vm766, %v658, %v850
    %v854 = vsel %vm766, 0, %v852
    %v855 = vcosq.f32.pop %v853
    %v856 = vsinq.f32.pop %v853
    %vm857 = vweird.f32 %v658
    %v858 = vand.u32 %v854, 3
    %vm859 = vcmp.lt.s32.totalorder %v858, 2
    %vm860 = vcmp.eq.s32.totalorder %v858, 0
    %v861 = vxor.u32 %v856, 2147483648
    %v862 = vsel %vm860, %v855, %v861
    %vm863 = vcmp.eq.s32.totalorder %v858, 2
    %v864 = vxor.u32 %v855, 2147483648
    %v865 = vsel %vm863, %v864, %v856
    %v866 = vsel %vm859, %v862, %v865
    %v867 = vsel %vm857, nan, %v866
    %s868 = scalar_lea.vmem [#allocation5], 64
    %869 = vst [vmem:[%s868] sm:$0xff] %v867
    // Predicated region
    $region10: #{tpu_custom_call.1} parent=1 // pred_check
      _
    $region11: #{tpu_custom_call.1} parent=1 // pred_check_branch
      %871 = sbr.rel (0) target = $region13
    $region12: #{tpu_custom_call.1} parent=1 // pred_region
      %s873 = ssub.s32 1152, 1152
      %874 = vsyncadd [#allocation4], %s873
      %s875 = sshll.u32 [#allocation5], 4
      %s876 = int_to_ptr.vmem [resolvable:$true] %s875
      %881 = dma.vmem_to_hbm [thread:$0]  %s876, 1152, %s1, [#allocation4], 128, 128, 8
    $region13: #{tpu_custom_call.1} parent=1 // pred_fallthru
      _
    // Predicated region
    $region14: #{tpu_custom_call.1} parent=1 // pred_check
      _
    $region15: #{tpu_custom_call.1} parent=1 // pred_check_branch
      %883 = sbr.rel (0) target = $region17
    $region16: #{tpu_custom_call.1} parent=1 // pred_region
      %884 = dma.done [#allocation4], 1152
    $region17: #{tpu_custom_call.1} parent=1 // pred_fallthru
      _
    %885 = vsyncpa [#allocation3], 1
    %886 = vsyncpa [#allocation4], 1

</llo_original>
